<compile_context>
chip_gen: v5e
topology: v5e:2x2
jax: 0.10.0
libtpu: 0.0.40
codegen_flags: <defaults>
</compile_context>

<pallas_src>
import functools

import jax
import jax.numpy as jnp
from jax.experimental import pallas as pl
from jax.experimental.pallas import tpu as pltpu


def _rl_policy_kernel(n_feature_layers, *refs):
    """Fused MLP kernel.

    refs = [x_ref,
            W1(bf16), b1(f32), ..., Wn, bn   (feature extractor, lane-padded),
            W_head(bf16), b_head(f32)        (fused, 128-padded heads),
            out_ref (bf16)]
    """
    x_ref = refs[0]
    out_ref = refs[-1]
    param_refs = refs[1:-1]

    # Activations in bf16 for the MXU; accumulate in f32.
    h = x_ref[...].astype(jnp.bfloat16)

    idx = 0
    for _ in range(n_feature_layers):
        w = param_refs[idx][...]          # bf16 (in_padded, out_padded)
        b = param_refs[idx + 1][...]      # f32  (1, out_padded)
        idx += 2
        y = jnp.dot(h, w, preferred_element_type=jnp.float32) + b
        h = jnp.maximum(y.astype(jnp.bfloat16), 0.0)   # bf16 ReLU (VPU)

    # Fused heads: one lane-dense matmul, one unmasked 128-wide bf16 store.
    w = param_refs[idx][...]
    b = param_refs[idx + 1][...]
    y = jnp.dot(h, w, preferred_element_type=jnp.float32) + b
    out_ref[...] = y.astype(out_ref.dtype)


def pack_rl_policy_params(feat_params, head_params):
    """One-time parameter packing (call once, reuse every forward step).

    - Hidden layers are zero-padded to 128-wide lanes (and matching K rows for
      the next layer); padded lanes carry zero bias so ReLU keeps them zero.
    - The 3 heads are fused into one weight, zero-padded to a 128-lane slab.
    - Weights are cast to bf16 (MXU-native); biases stay f32.
    """
    assert len(head_params) == 3

    def rup(n, m):
        return ((n + m - 1) // m) * m

    in_actual = (feat_params[0][0].shape[0] if feat_params
                 else head_params[0][0].shape[0])
    input_dim = in_actual
    in_padded = in_actual                       # x feature dim is not padded

    packed = []                                  # [(W bf16, b f32), ...]
    for w, b in feat_params:
        fan_in, fan_out = w.shape
        out_padded = rup(max(fan_out, 128), 128)
        wp = jnp.zeros((in_padded, out_padded), jnp.float32)
        wp = wp.at[:fan_in, :fan_out].set(w)
        bp = jnp.zeros((1, out_padded), jnp.float32)
        bp = bp.at[:, :fan_out].set(jnp.reshape(b, (1, -1)))
        packed.append((wp.astype(jnp.bfloat16), bp))
        in_actual, in_padded = fan_out, out_padded

    hand_size = head_params[0][0].shape[1]
    head_dim = sum(w.shape[1] for w, _ in head_params)      # hand_size + 2 + 2
    head_padded = rup(max(head_dim, 128), 128)
    wh = jnp.zeros((in_padded, head_padded), jnp.float32)
    bh = jnp.zeros((1, head_padded), jnp.float32)
    off = 0
    for w, b in head_params:
        fan_in, fan_out = w.shape
        wh = wh.at[:fan_in, off:off + fan_out].set(w)
        bh = bh.at[:, off:off + fan_out].set(jnp.reshape(b, (1, -1)))
        off += fan_out
    packed.append((wh.astype(jnp.bfloat16), bh))

    flat_params = []
    for w, b in packed:
        flat_params.append(w)
        flat_params.append(b)

    meta = {
        "n_feat": len(feat_params),
        "input_dim": input_dim,
        "hand_size": hand_size,
        "head_dim": head_dim,
        "head_padded": head_padded,
        "padded_out_dims": [w.shape[1] for w, _ in packed],
        "params_bytes": int(sum(w.size * 2 + b.size * 4 for w, b in packed)),
    }
    return flat_params, meta


def rl_policy_forward(x, flat_params, meta, *, block_b=4096):
    """Run the fused RLPolicy forward pass.

    Args:
      x: (batch, input_dim) float32.
      flat_params, meta: output of pack_rl_policy_params().
      block_b: desired rows per grid step (auto-clamped for VMEM / megacore).

    Returns:
      (card_logits, coord_output, orientation_logits) as f32 arrays.
    """
    batch, input_dim = x.shape
    assert input_dim == meta["input_dim"]
    n_feat = meta["n_feat"]
    head_padded = meta["head_padded"]
    hand_size = meta["hand_size"]

    # --- Batch block sizing -------------------------------------------------
    # Double-buffered per-row VMEM traffic: x (f32) in + fused slab (bf16) out.
    row_bytes = 2 * (input_dim * 4 + head_padded * 2)
    vmem_budget = 24 << 20                       # safe on v5e/v6e/v7x
    max_rows = max(8, vmem_budget // row_bytes)
    blk = max(1, min(block_b, max_rows, batch))
    if batch >= 16:
        blk = min(blk, (batch + 1) // 2)         # >=2 grid steps -> both v7x TCs busy
    if blk >= batch:
        blk = batch                              # single full block (always legal)
    else:
        blk = max(8, (blk // 8) * 8)             # sublane-aligned block
        if blk >= batch:
            blk = batch
    grid = (pl.cdiv(batch, blk),)                # ragged tail handled by Pallas

    # --- Specs: x/out tiled over batch, tiny params fully VMEM-resident. ----
    in_specs = [pl.BlockSpec((blk, input_dim), lambda i: (i, 0))]
    for p in flat_params:
        in_specs.append(pl.BlockSpec(p.shape, lambda i: (0, 0)))
    out_spec = pl.BlockSpec((blk, head_padded), lambda i: (i, 0))

    # --- Cost estimate so XLA schedules this small custom call sensibly. ----
    dims = [input_dim] + list(meta["padded_out_dims"])
    flops = sum(2 * batch * dims[i] * dims[i + 1] for i in range(len(dims) - 1))
    bytes_accessed = int(x.size * 4 + meta["params_bytes"]
                         + batch * head_padded * 2)
    cost = pl.CostEstimate(flops=flops, transcendentals=0,
                           bytes_accessed=bytes_accessed)

    # Raise scoped VMEM explicitly (v5e default is only 16 MiB); cap well under
    # v7x's 64 MiB physical per TC.
    vmem_need = row_bytes * blk + 2 * meta["params_bytes"] + (4 << 20)
    vmem_limit = int(min(48 << 20, max(32 << 20, vmem_need)))

    fused = pl.pallas_call(
        functools.partial(_rl_policy_kernel, n_feat),
        out_shape=jax.ShapeDtypeStruct((batch, head_padded), jnp.bfloat16),
        grid=grid,
        in_specs=in_specs,
        out_specs=out_spec,
        compiler_params=pltpu.CompilerParams(
            dimension_semantics=("parallel",),   # batch axis: megacore-shardable
            vmem_limit_bytes=vmem_limit),
        cost_estimate=cost,
    )(x, *flat_params)

    fused = fused.astype(jnp.float32)
    card_logits = fused[:, :hand_size]
    coord_output = fused[:, hand_size:hand_size + 2]
    orient_logits = fused[:, hand_size + 2:hand_size + 4]
    return card_logits, coord_output, orient_logits


def init_rl_policy_params(key, input_dim, hidden_layers, hand_size):
    """Deterministic init mirroring nn.Linear default (U(-1/sqrt(fan_in), .)).

    Weights are produced already transposed to (in_features, out_features);
    biases are (1, out_features).
    """
    def linear(key, fan_in, fan_out):
        kw, kb = jax.random.split(key)
        bound = 1.0 / jnp.sqrt(float(fan_in))
        w = jax.random.uniform(kw, (fan_in, fan_out), jnp.float32, -bound, bound)
        b = jax.random.uniform(kb, (1, fan_out), jnp.float32, -bound, bound)
        return w, b

    feat_params = []
    current = input_dim
    for h in hidden_layers:
        key, sub = jax.random.split(key)
        feat_params.append(linear(sub, current, h))
        current = h

    head_params = []
    for out_dim in (hand_size, 2, 2):  # card_head, coord_head, orient_head
        key, sub = jax.random.split(key)
        head_params.append(linear(sub, current, out_dim))

    return feat_params, head_params


def reference_forward(x, feat_params, head_params):
    """Pure-JAX f32 reference for correctness checking."""
    h = x
    for w, b in feat_params:
        h = jnp.maximum(h @ w + b, 0.0)
    return tuple(h @ w + b for w, b in head_params)


if __name__ == "__main__":
    # Small, module-consistent shapes. batch=20 with block_b=8 exercises the
    # batch grid (3 steps) and the ragged-tail (no wrapper pad) path.
    batch = 20
    input_dim = 32
    hidden_layers = (64, 32)
    hand_size = 8

    key = jax.random.PRNGKey(0)
    key, kx = jax.random.split(key)
    x = jax.random.normal(kx, (batch, input_dim), dtype=jnp.float32)

    feat_params, head_params = init_rl_policy_params(
        key, input_dim, hidden_layers, hand_size
    )

    # One-time packing (head fusion, lane padding, bf16 weight casts).
    flat_params, meta = pack_rl_policy_params(feat_params, head_params)

    card_logits, coord_out, orient_logits = rl_policy_forward(
        x, flat_params, meta, block_b=8
    )
    jax.block_until_ready((card_logits, coord_out, orient_logits))

    # Sanity-check against the pure-JAX f32 reference (bf16 matmul operands and
    # bf16 output slab -> looser tolerance than an all-f32 kernel).
    ref_card, ref_coord, ref_orient = reference_forward(x, feat_params, head_params)
    assert card_logits.shape == (batch, hand_size)
    assert coord_out.shape == (batch, 2)
    assert orient_logits.shape == (batch, 2)
    assert jnp.allclose(card_logits, ref_card, atol=5e-2, rtol=5e-2)
    assert jnp.allclose(coord_out, ref_coord, atol=5e-2, rtol=5e-2)
    assert jnp.allclose(orient_logits, ref_orient, atol=5e-2, rtol=5e-2)

    print("KERNEL_OK")
</pallas_src>

<mosaic_0001>
module attributes {stable_mosaic.version = 11 : i64} {
  func.func @_rl_policy_kernel(%arg0: i32, %arg1: memref<8x32xf32, #tpu.memory_space<vmem>>, %arg2: memref<32x128xbf16, #tpu.memory_space<vmem>>, %arg3: memref<1x128xf32, #tpu.memory_space<vmem>>, %arg4: memref<128x128xbf16, #tpu.memory_space<vmem>>, %arg5: memref<1x128xf32, #tpu.memory_space<vmem>>, %arg6: memref<128x128xbf16, #tpu.memory_space<vmem>>, %arg7: memref<1x128xf32, #tpu.memory_space<vmem>>, %arg8: memref<8x128xbf16, #tpu.memory_space<vmem>>) attributes {dimension_semantics = [#tpu.dimension_semantics<parallel>], iteration_bounds = array<i64: 3>, scalar_prefetch = 0 : i64, scratch_operands = 0 : i64, tpu.core_type = #tpu.core_type<tc>, window_params = [{transform_indices = @transform_0, window_bounds = array<i64: 8, 32>}, {pipeline_mode = #tpu.pipeline_mode<synchronous>, transform_indices = @transform_1, window_bounds = array<i64: 32, 128>}, {pipeline_mode = #tpu.pipeline_mode<synchronous>, transform_indices = @transform_2, window_bounds = array<i64: 1, 128>}, {pipeline_mode = #tpu.pipeline_mode<synchronous>, transform_indices = @transform_3, window_bounds = array<i64: 128, 128>}, {pipeline_mode = #tpu.pipeline_mode<synchronous>, transform_indices = @transform_4, window_bounds = array<i64: 1, 128>}, {pipeline_mode = #tpu.pipeline_mode<synchronous>, transform_indices = @transform_5, window_bounds = array<i64: 128, 128>}, {pipeline_mode = #tpu.pipeline_mode<synchronous>, transform_indices = @transform_6, window_bounds = array<i64: 1, 128>}, {transform_indices = @transform_7, window_bounds = array<i64: 8, 128>}]} {
    %c0 = arith.constant 0 : index
    %c0_0 = arith.constant 0 : index
    %0 = vector.load %arg1[%c0, %c0_0] : memref<8x32xf32, #tpu.memory_space<vmem>>, vector<8x32xf32>
    %1 = arith.truncf %0 : vector<8x32xf32> to vector<8x32xbf16>
    %c0_1 = arith.constant 0 : index
    %c0_2 = arith.constant 0 : index
    %2 = vector.load %arg2[%c0_1, %c0_2] : memref<32x128xbf16, #tpu.memory_space<vmem>>, vector<32x128xbf16>
    %c0_3 = arith.constant 0 : index
    %c0_4 = arith.constant 0 : index
    %3 = vector.load %arg3[%c0_3, %c0_4] : memref<1x128xf32, #tpu.memory_space<vmem>>, vector<1x128xf32>
    %cst = arith.constant dense<0.000000e+00> : vector<8x128xf32>
    %4 = tpu.matmul %1, %2, %cst {dimension_numbers = #tpu.dot_dimension_numbers<[1], [0], [0], [1], [0, 0, 1, 1], [], []>} : vector<8x32xbf16>, vector<32x128xbf16>, vector<8x128xf32> -> vector<8x128xf32>
    %5 = vector.broadcast %3 : vector<1x128xf32> to vector<8x128xf32>
    %6 = arith.addf %4, %5 : vector<8x128xf32>
    %7 = arith.truncf %6 : vector<8x128xf32> to vector<8x128xbf16>
    %cst_5 = arith.constant 0.000000e+00 : bf16
    %8 = vector.broadcast %cst_5 : bf16 to vector<8x128xbf16>
    %9 = arith.maximumf %7, %8 : vector<8x128xbf16>
    %c0_6 = arith.constant 0 : index
    %c0_7 = arith.constant 0 : index
    %10 = vector.load %arg4[%c0_6, %c0_7] : memref<128x128xbf16, #tpu.memory_space<vmem>>, vector<128x128xbf16>
    %c0_8 = arith.constant 0 : index
    %c0_9 = arith.constant 0 : index
    %11 = vector.load %arg5[%c0_8, %c0_9] : memref<1x128xf32, #tpu.memory_space<vmem>>, vector<1x128xf32>
    %cst_10 = arith.constant dense<0.000000e+00> : vector<8x128xf32>
    %12 = tpu.matmul %9, %10, %cst_10 {dimension_numbers = #tpu.dot_dimension_numbers<[1], [0], [0], [1], [0, 0, 1, 1], [], []>} : vector<8x128xbf16>, vector<128x128xbf16>, vector<8x128xf32> -> vector<8x128xf32>
    %13 = vector.broadcast %11 : vector<1x128xf32> to vector<8x128xf32>
    %14 = arith.addf %12, %13 : vector<8x128xf32>
    %15 = arith.truncf %14 : vector<8x128xf32> to vector<8x128xbf16>
    %cst_11 = arith.constant 0.000000e+00 : bf16
    %16 = vector.broadcast %cst_11 : bf16 to vector<8x128xbf16>
    %17 = arith.maximumf %15, %16 : vector<8x128xbf16>
    %c0_12 = arith.constant 0 : index
    %c0_13 = arith.constant 0 : index
    %18 = vector.load %arg6[%c0_12, %c0_13] : memref<128x128xbf16, #tpu.memory_space<vmem>>, vector<128x128xbf16>
    %c0_14 = arith.constant 0 : index
    %c0_15 = arith.constant 0 : index
    %19 = vector.load %arg7[%c0_14, %c0_15] : memref<1x128xf32, #tpu.memory_space<vmem>>, vector<1x128xf32>
    %cst_16 = arith.constant dense<0.000000e+00> : vector<8x128xf32>
    %20 = tpu.matmul %17, %18, %cst_16 {dimension_numbers = #tpu.dot_dimension_numbers<[1], [0], [0], [1], [0, 0, 1, 1], [], []>} : vector<8x128xbf16>, vector<128x128xbf16>, vector<8x128xf32> -> vector<8x128xf32>
    %21 = vector.broadcast %19 : vector<1x128xf32> to vector<8x128xf32>
    %22 = arith.addf %20, %21 : vector<8x128xf32>
    %23 = arith.truncf %22 : vector<8x128xf32> to vector<8x128xbf16>
    %c0_17 = arith.constant 0 : index
    %c0_18 = arith.constant 0 : index
    %24 = vector.load %arg8[%c0_17, %c0_18] : memref<8x128xbf16, #tpu.memory_space<vmem>>, vector<8x128xbf16>
    tpu.vector_store %arg8[%c0_17, %c0_18], %23 {strides = array<i32>} : memref<8x128xbf16, #tpu.memory_space<vmem>>, vector<8x128xbf16>,
    return
  }
  func.func @transform_0(%arg0: i32) -> (i32, i32) {
    %c0_i32 = arith.constant 0 : i32
    %c0_i32_0 = arith.constant 0 : i32
    return %arg0, %c0_i32 : i32, i32
  }
  func.func @transform_1(%arg0: i32) -> (i32, i32) {
    %c0_i32 = arith.constant 0 : i32
    %c0_i32_0 = arith.constant 0 : i32
    %c0_i32_1 = arith.constant 0 : i32
    return %c0_i32, %c0_i32_0 : i32, i32
  }
  func.func @transform_2(%arg0: i32) -> (i32, i32) {
    %c0_i32 = arith.constant 0 : i32
    %c0_i32_0 = arith.constant 0 : i32
    %c0_i32_1 = arith.constant 0 : i32
    return %c0_i32, %c0_i32_0 : i32, i32
  }
  func.func @transform_3(%arg0: i32) -> (i32, i32) {
    %c0_i32 = arith.constant 0 : i32
    %c0_i32_0 = arith.constant 0 : i32
    %c0_i32_1 = arith.constant 0 : i32
    return %c0_i32, %c0_i32_0 : i32, i32
  }
  func.func @transform_4(%arg0: i32) -> (i32, i32) {
    %c0_i32 = arith.constant 0 : i32
    %c0_i32_0 = arith.constant 0 : i32
    %c0_i32_1 = arith.constant 0 : i32
    return %c0_i32, %c0_i32_0 : i32, i32
  }
  func.func @transform_5(%arg0: i32) -> (i32, i32) {
    %c0_i32 = arith.constant 0 : i32
    %c0_i32_0 = arith.constant 0 : i32
    %c0_i32_1 = arith.constant 0 : i32
    return %c0_i32, %c0_i32_0 : i32, i32
  }
  func.func @transform_6(%arg0: i32) -> (i32, i32) {
    %c0_i32 = arith.constant 0 : i32
    %c0_i32_0 = arith.constant 0 : i32
    %c0_i32_1 = arith.constant 0 : i32
    return %c0_i32, %c0_i32_0 : i32, i32
  }
  func.func @transform_7(%arg0: i32) -> (i32, i32) {
    %c0_i32 = arith.constant 0 : i32
    %c0_i32_0 = arith.constant 0 : i32
    return %arg0, %c0_i32 : i32, i32
  }
}

</mosaic_0001>

<llo_original>
// kernel: tpu_custom_call.1
$region0: #{tpu_custom_call.1}
  #allocation0 [shape = 'u32[]', space=smem, size = 0x4, offset = 0x4, fixed_abs, tag = 'smem constant byte address 0x4 - core index']
  #allocation1 [shape = 'u32[72,128]{1,0:T(1,128)}', space=vmem, size = 0x9000, scoped, tag = 'internal scratch']
  %s0 = inlined_call_operand.hbm [shape: f32[20,32], index: 0, kind: input, shape index: {}]
  %s1 = inlined_call_operand.hbm [shape: bf16[32,128], index: 1, kind: input, shape index: {}]
  %s2 = inlined_call_operand.vmem [shape: f32[1,128], index: 2, kind: input, shape index: {}]
  %s3 = inlined_call_operand.hbm [shape: bf16[128,128], index: 3, kind: input, shape index: {}]
  %s4 = inlined_call_operand.vmem [shape: f32[1,128], index: 4, kind: input, shape index: {}]
  %s5 = inlined_call_operand.hbm [shape: bf16[128,128], index: 5, kind: input, shape index: {}]
  %s6 = inlined_call_operand.vmem [shape: f32[1,128], index: 6, kind: input, shape index: {}]
  %s7 = inlined_call_operand.hbm [shape: bf16[20,128], index: 7, kind: output, shape index: {}]
  %s8 = sld [smem:[#allocation0]]
  $region77: #{tpu_custom_call.1} parent=0
    _
  %s10 = ssub.s32 1, %s8
  %s11 = scalar_select 0, %s10, %s8
  $region1: #{tpu_custom_call.1} parent=0
    #allocation2 [shape = 'u8[8192]{0}', space=vmem, size = 0x2000, scoped, tag = 'input window, operand 0']
    #allocation3 [shape = 's32[2]{0}', space=sflag, size = 0x8, scoped, tag = 'scoped memory for tpu_custom_call.1']
    #allocation4 [shape = 's32[2]{0}', space=sflag, size = 0x8, scoped, tag = 'scoped memory for tpu_custom_call.1']
    #allocation5 [shape = 'u8[8192]{0}', space=vmem, size = 0x2000, scoped, tag = 'input window, operand 1, single buffered']
    #allocation6 [shape = 's32[1]{0}', space=sflag, size = 0x4, scoped, tag = 'scoped memory for tpu_custom_call.1']
    #allocation7 [shape = 'u8[32768]{0}', space=vmem, size = 0x8000, scoped, tag = 'input window, operand 3, single buffered']
    #allocation8 [shape = 'u8[32768]{0}', space=vmem, size = 0x8000, scoped, tag = 'input window, operand 5, single buffered']
    #allocation9 [shape = 's32[1]{0}', space=sflag, size = 0x4, scoped, tag = 'scoped memory for tpu_custom_call.1']
    #allocation10 [shape = 'u8[4096]{0}', space=vmem, size = 0x1000, scoped, tag = 'output window, operand 0']
    %12 = vsyncpa [#allocation3], 0
    %s13 = scalar_lea.sflag [#allocation3], 1
    %14 = vsyncpa %s13, 0
    %15 = vsyncpa [#allocation6], 0
    %16 = vsyncpa [#allocation9], 0
    %17 = vsyncpa [#allocation4], 0
    %s18 = scalar_lea.sflag [#allocation4], 1
    %19 = vsyncpa %s18, 0
    loop: start=0, step=1, limit=5
    $region2: #{tpu_custom_call.1} parent=1 // loop_pre_header
      _
    $region3: #{tpu_custom_call.1} parent=1 // loop_header
      %s21 = sphi 0, %s25
      %p22 = scmp.ge.s32.totalorder %s21, 5
      %s31 = sphi 0, %s33
      %s34 = sphi 0, %s31
      %s35 = sphi 0, %s34
      %s51 = sphi 0, %s35
      %s55 = sphi 0, %s55
      %s57 = sphi 0, %s55
      %s58 = sphi 0, %s57
      %s72 = sphi 0, %s58
      %s76 = sphi 0, %s76
      %s78 = sphi 0, %s76
      %s79 = sphi 0, %s78
      %s93 = sphi 0, %s79
      %s97 = sphi 0, %s97
      %s99 = sphi 0, %s97
      %s100 = sphi 0, %s99
      %s114 = sphi 0, %s100
      %s118 = sphi 0, %s118
      %s120 = sphi 0, %s118
      %s121 = sphi 0, %s120
      %s135 = sphi 0, %s121
      %s139 = sphi 0, %s139
      %s141 = sphi 0, %s139
      %s142 = sphi 0, %s141
      %s156 = sphi 0, %s142
      %s160 = sphi 0, %s160
      %s162 = sphi 0, %s160
      %s163 = sphi 0, %s162
      %s177 = sphi 0, %s163
      %s183 = sphi 0, %s185
      %s186 = sphi 0, %s183
      %s187 = sphi 0, %s186
      %s203 = sphi 0, %s187
    $region4: #{tpu_custom_call.1} parent=1 // loop_header_branch
      %24 = sbr.rel (%p22) target = $region8
    $region5: #{tpu_custom_call.1} parent=1 // loop_body
      %s26 = ssub.s32 %s21, 1
      %s27 = ssub.s32 %s21, 2
      %s28 = sadd.s32 %s21, 1
      %s29 = ssub.s32 %s21, %s28
      %p30 = scmp.eq.s32.totalorder %s29, 0
      %s32 = sadd.s32 %s31, 1
      %s33 = scalar_select %p30, %s31, %s32
      %p36 = pneg %p30
      %p37 = scmp.eq.s32.totalorder %s21, 2
      %p38 = por %p36, %p37
      %p39 = scmp.ne.s32.totalorder %s31, %s34
      %p40 = scmp.eq.s32.totalorder %s21, 0
      %p41 = por %p39, %p40
      %p42 = scmp.ne.s32.totalorder %s31, %s34
      %p43 = scmp.eq.s32.totalorder %s26, 2
      %p44 = por %p42, %p43
      %p45 = scmp.ne.s32.totalorder %s34, %s35
      %p46 = scmp.eq.s32.totalorder %s26, 0
      %p47 = por %p45, %p46
      %p48 = scmp.ne.s32.totalorder %s34, %s35
      %p49 = scmp.eq.s32.totalorder %s27, 2
      %p50 = por %p48, %p49
      %p52 = scmp.ne.s32.totalorder %s35, %s51
      %p53 = scmp.eq.s32.totalorder %s27, 0
      %p54 = por %p52, %p53
      %s56 = sadd.s32 %s55, 1
      %p59 = scmp.eq.s32.totalorder %s21, 2
      %p60 = scmp.ne.s32.totalorder %s55, %s57
      %p61 = scmp.eq.s32.totalorder %s21, 0
      %p62 = por %p60, %p61
      %p63 = scmp.ne.s32.totalorder %s55, %s57
      %p64 = scmp.eq.s32.totalorder %s26, 2
      %p65 = por %p63, %p64
      %p66 = scmp.ne.s32.totalorder %s57, %s58
      %p67 = scmp.eq.s32.totalorder %s26, 0
      %p68 = por %p66, %p67
      %p69 = scmp.ne.s32.totalorder %s57, %s58
      %p70 = scmp.eq.s32.totalorder %s27, 2
      %p71 = por %p69, %p70
      %p73 = scmp.ne.s32.totalorder %s58, %s72
      %p74 = scmp.eq.s32.totalorder %s27, 0
      %p75 = por %p73, %p74
      %s77 = sadd.s32 %s76, 1
      %p80 = scmp.eq.s32.totalorder %s21, 2
      %p81 = scmp.ne.s32.totalorder %s76, %s78
      %p82 = scmp.eq.s32.totalorder %s21, 0
      %p83 = por %p81, %p82
      %p84 = scmp.ne.s32.totalorder %s76, %s78
      %p85 = scmp.eq.s32.totalorder %s26, 2
      %p86 = por %p84, %p85
      %p87 = scmp.ne.s32.totalorder %s78, %s79
      %p88 = scmp.eq.s32.totalorder %s26, 0
      %p89 = por %p87, %p88
      %p90 = scmp.ne.s32.totalorder %s78, %s79
      %p91 = scmp.eq.s32.totalorder %s27, 2
      %p92 = por %p90, %p91
      %p94 = scmp.ne.s32.totalorder %s79, %s93
      %p95 = scmp.eq.s32.totalorder %s27, 0
      %p96 = por %p94, %p95
      %s98 = sadd.s32 %s97, 1
      %p101 = scmp.eq.s32.totalorder %s21, 2
      %p102 = scmp.ne.s32.totalorder %s97, %s99
      %p103 = scmp.eq.s32.totalorder %s21, 0
      %p104 = por %p102, %p103
      %p105 = scmp.ne.s32.totalorder %s97, %s99
      %p106 = scmp.eq.s32.totalorder %s26, 2
      %p107 = por %p105, %p106
      %p108 = scmp.ne.s32.totalorder %s99, %s100
      %p109 = scmp.eq.s32.totalorder %s26, 0
      %p110 = por %p108, %p109
      %p111 = scmp.ne.s32.totalorder %s99, %s100
      %p112 = scmp.eq.s32.totalorder %s27, 2
      %p113 = por %p111, %p112
      %p115 = scmp.ne.s32.totalorder %s100, %s114
      %p116 = scmp.eq.s32.totalorder %s27, 0
      %p117 = por %p115, %p116
      %s119 = sadd.s32 %s118, 1
      %p122 = scmp.eq.s32.totalorder %s21, 2
      %p123 = scmp.ne.s32.totalorder %s118, %s120
      %p124 = scmp.eq.s32.totalorder %s21, 0
      %p125 = por %p123, %p124
      %p126 = scmp.ne.s32.totalorder %s118, %s120
      %p127 = scmp.eq.s32.totalorder %s26, 2
      %p128 = por %p126, %p127
      %p129 = scmp.ne.s32.totalorder %s120, %s121
      %p130 = scmp.eq.s32.totalorder %s26, 0
      %p131 = por %p129, %p130
      %p132 = scmp.ne.s32.totalorder %s120, %s121
      %p133 = scmp.eq.s32.totalorder %s27, 2
      %p134 = por %p132, %p133
      %p136 = scmp.ne.s32.totalorder %s121, %s135
      %p137 = scmp.eq.s32.totalorder %s27, 0
      %p138 = por %p136, %p137
      %s140 = sadd.s32 %s139, 1
      %p143 = scmp.eq.s32.totalorder %s21, 2
      %p144 = scmp.ne.s32.totalorder %s139, %s141
      %p145 = scmp.eq.s32.totalorder %s21, 0
      %p146 = por %p144, %p145
      %p147 = scmp.ne.s32.totalorder %s139, %s141
      %p148 = scmp.eq.s32.totalorder %s26, 2
      %p149 = por %p147, %p148
      %p150 = scmp.ne.s32.totalorder %s141, %s142
      %p151 = scmp.eq.s32.totalorder %s26, 0
      %p152 = por %p150, %p151
      %p153 = scmp.ne.s32.totalorder %s141, %s142
      %p154 = scmp.eq.s32.totalorder %s27, 2
      %p155 = por %p153, %p154
      %p157 = scmp.ne.s32.totalorder %s142, %s156
      %p158 = scmp.eq.s32.totalorder %s27, 0
      %p159 = por %p157, %p158
      %s161 = sadd.s32 %s160, 1
      %p164 = scmp.eq.s32.totalorder %s21, 2
      %p165 = scmp.ne.s32.totalorder %s160, %s162
      %p166 = scmp.eq.s32.totalorder %s21, 0
      %p167 = por %p165, %p166
      %p168 = scmp.ne.s32.totalorder %s160, %s162
      %p169 = scmp.eq.s32.totalorder %s26, 2
      %p170 = por %p168, %p169
      %p171 = scmp.ne.s32.totalorder %s162, %s163
      %p172 = scmp.eq.s32.totalorder %s26, 0
      %p173 = por %p171, %p172
      %p174 = scmp.ne.s32.totalorder %s162, %s163
      %p175 = scmp.eq.s32.totalorder %s27, 2
      %p176 = por %p174, %p175
      %p178 = scmp.ne.s32.totalorder %s163, %s177
      %p179 = scmp.eq.s32.totalorder %s27, 0
      %p180 = por %p178, %p179
      %s181 = ssub.s32 %s21, %s28
      %p182 = scmp.eq.s32.totalorder %s181, 0
      %s184 = sadd.s32 %s183, 1
      %s185 = scalar_select %p182, %s183, %s184
      %p188 = pneg %p182
      %p189 = scmp.eq.s32.totalorder %s21, 2
      %p190 = por %p188, %p189
      %p191 = scmp.ne.s32.totalorder %s183, %s186
      %p192 = scmp.eq.s32.totalorder %s21, 0
      %p193 = por %p191, %p192
      %p194 = scmp.ne.s32.totalorder %s183, %s186
      %p195 = scmp.eq.s32.totalorder %s26, 2
      %p196 = por %p194, %p195
      %p197 = scmp.ne.s32.totalorder %s186, %s187
      %p198 = scmp.eq.s32.totalorder %s26, 0
      %p199 = por %p197, %p198
      %p200 = scmp.ne.s32.totalorder %s186, %s187
      %p201 = scmp.eq.s32.totalorder %s27, 2
      %p202 = por %p200, %p201
      %p204 = scmp.ne.s32.totalorder %s187, %s203
      %p205 = scmp.eq.s32.totalorder %s27, 0
      %p206 = por %p204, %p205
      %p207 = scmp.le.s32.totalorder 1, %s21
      %p208 = scmp.lt.s32.totalorder %s21, 4
      %p209 = pnand %p207, %p208
      %p210 = pneg %p209
      // Predicated region
      $region9: #{tpu_custom_call.1} parent=5 // pred_check
        _
      $region10: #{tpu_custom_call.1} parent=5 // pred_check_branch
        %212 = sbr.rel (%p209) target = $region12
      $region11: #{tpu_custom_call.1} parent=5 // pred_region
        %s213 = ssub.s32 %s21, 1
        // Predicated region
        $region13: #{tpu_custom_call.1} parent=11 // pred_check
          %p214 = pneg %p68
        $region14: #{tpu_custom_call.1} parent=11 // pred_check_branch
          %216 = sbr.rel (%p214) target = $region16
        $region15: #{tpu_custom_call.1} parent=11 // pred_region
          %218 = vsyncadd [#allocation6], 0
          %s219 = sshll.u32 %s1, 4
          %s220 = int_to_ptr.hbm [resolvable:$true] %s219
          %s221 = sshll.u32 [#allocation5], 4
          %s222 = int_to_ptr.vmem [resolvable:$true] %s221
          %227 = dma.hbm_to_vmem [thread:$0]  %s220, 256, %s222, [#allocation6], 64, 64, 4
        $region16: #{tpu_custom_call.1} parent=11 // pred_fallthru
          _
        // Predicated region
        $region17: #{tpu_custom_call.1} parent=11 // pred_check
          %p228 = pneg %p89
        $region18: #{tpu_custom_call.1} parent=11 // pred_check_branch
          %230 = sbr.rel (%p228) target = $region20
        $region19: #{tpu_custom_call.1} parent=11 // pred_region
          _
        $region20: #{tpu_custom_call.1} parent=11 // pred_fallthru
          _
        // Predicated region
        $region21: #{tpu_custom_call.1} parent=11 // pred_check
          %p231 = pneg %p110
        $region22: #{tpu_custom_call.1} parent=11 // pred_check_branch
          %233 = sbr.rel (%p231) target = $region24
        $region23: #{tpu_custom_call.1} parent=11 // pred_region
          %235 = vsyncadd [#allocation6], 0
          %s236 = sshll.u32 %s3, 4
          %s237 = int_to_ptr.hbm [resolvable:$true] %s236
          %s238 = sshll.u32 [#allocation7], 4
          %s239 = int_to_ptr.vmem [resolvable:$true] %s238
          %244 = dma.hbm_to_vmem [thread:$0]  %s237, 1024, %s239, [#allocation6], 64, 64, 4
        $region24: #{tpu_custom_call.1} parent=11 // pred_fallthru
          _
        // Predicated region
        $region25: #{tpu_custom_call.1} parent=11 // pred_check
          %p245 = pneg %p131
        $region26: #{tpu_custom_call.1} parent=11 // pred_check_branch
          %247 = sbr.rel (%p245) target = $region28
        $region27: #{tpu_custom_call.1} parent=11 // pred_region
          _
        $region28: #{tpu_custom_call.1} parent=11 // pred_fallthru
          _
        // Predicated region
        $region29: #{tpu_custom_call.1} parent=11 // pred_check
          %p248 = pneg %p152
        $region30: #{tpu_custom_call.1} parent=11 // pred_check_branch
          %250 = sbr.rel (%p248) target = $region32
        $region31: #{tpu_custom_call.1} parent=11 // pred_region
          %252 = vsyncadd [#allocation9], 0
          %s253 = sshll.u32 %s5, 4
          %s254 = int_to_ptr.hbm [resolvable:$true] %s253
          %s255 = sshll.u32 [#allocation8], 4
          %s256 = int_to_ptr.vmem [resolvable:$true] %s255
          %261 = dma.hbm_to_vmem [thread:$0]  %s254, 1024, %s256, [#allocation9], 64, 64, 4
        $region32: #{tpu_custom_call.1} parent=11 // pred_fallthru
          _
        // Predicated region
        $region33: #{tpu_custom_call.1} parent=11 // pred_check
          %p262 = pneg %p173
        $region34: #{tpu_custom_call.1} parent=11 // pred_check_branch
          %264 = sbr.rel (%p262) target = $region36
        $region35: #{tpu_custom_call.1} parent=11 // pred_region
          _
        $region36: #{tpu_custom_call.1} parent=11 // pred_fallthru
          _
      $region12: #{tpu_custom_call.1} parent=5 // pred_fallthru
        _
      %p265 = scmp.lt.s32.totalorder %s21, 3
      // Predicated region
      $region37: #{tpu_custom_call.1} parent=5 // pred_check
        %p266 = pneg %p265
      $region38: #{tpu_custom_call.1} parent=5 // pred_check_branch
        %268 = sbr.rel (%p266) target = $region40
      $region39: #{tpu_custom_call.1} parent=5 // pred_region
        // Predicated region
        $region41: #{tpu_custom_call.1} parent=39 // pred_check
          %p269 = pneg %p41
        $region42: #{tpu_custom_call.1} parent=39 // pred_check_branch
          %271 = sbr.rel (%p269) target = $region44
        $region43: #{tpu_custom_call.1} parent=39 // pred_region
          %s272 = sand.u32 %s31, 1
          %s273 = scalar_lea.sflag [#allocation3], %s272
          %s274 = sand.u32 %s31, 1
          %s275 = smul.addr %s274, 8
          %s276 = scalar_lea.vmem [#allocation2], %s275
          %278 = vsyncadd %s273, 0
          %s279 = smul.addr %s21, 8
          %s280 = scalar_lea.hbm %s0, %s279
          %s282 = sshll.u32 %s280, 4
          %s283 = int_to_ptr.hbm [resolvable:$true] %s282
          %s284 = sshll.u32 %s276, 4
          %s285 = int_to_ptr.vmem [resolvable:$true] %s284
          %287 = dma.hbm_to_vmem [thread:$0]  %s283, 128, %s285, %s273
        $region44: #{tpu_custom_call.1} parent=39 // pred_fallthru
          _
      $region40: #{tpu_custom_call.1} parent=5 // pred_fallthru
        _
      %p288 = scmp.le.s32.totalorder 1, %s21
      %p289 = scmp.lt.s32.totalorder %s21, 4
      %p290 = pnand %p288, %p289
      %p291 = pneg %p290
      // Predicated region
      $region45: #{tpu_custom_call.1} parent=5 // pred_check
        _
      $region46: #{tpu_custom_call.1} parent=5 // pred_check_branch
        %293 = sbr.rel (%p290) target = $region48
      $region47: #{tpu_custom_call.1} parent=5 // pred_region
        %s294 = ssub.s32 %s21, 1
        %s295 = sand.u32 %s34, 1
        %s296 = scalar_lea.sflag [#allocation3], %s295
        %s297 = sand.u32 %s34, 1
        %s298 = smul.addr %s297, 8
        %s299 = scalar_lea.vmem [#allocation2], %s298
        // Predicated region
        $region49: #{tpu_custom_call.1} parent=47 // pred_check
          %p300 = pneg %p47
        $region50: #{tpu_custom_call.1} parent=47 // pred_check_branch
          %302 = sbr.rel (%p300) target = $region52
        $region51: #{tpu_custom_call.1} parent=47 // pred_region
          %304 = dma.done %s296, 128
        $region52: #{tpu_custom_call.1} parent=47 // pred_fallthru
          _
        // Predicated region
        $region53: #{tpu_custom_call.1} parent=47 // pred_check
          %p305 = pneg %p68
        $region54: #{tpu_custom_call.1} parent=47 // pred_check_branch
          %307 = sbr.rel (%p305) target = $region56
        $region55: #{tpu_custom_call.1} parent=47 // pred_region
          %309 = dma.done [#allocation6], 256
        $region56: #{tpu_custom_call.1} parent=47 // pred_fallthru
          _
        // Predicated region
        $region57: #{tpu_custom_call.1} parent=47 // pred_check
          %p310 = pneg %p110
        $region58: #{tpu_custom_call.1} parent=47 // pred_check_branch
          %312 = sbr.rel (%p310) target = $region60
        $region59: #{tpu_custom_call.1} parent=47 // pred_region
          %314 = dma.done [#allocation6], 1024
        $region60: #{tpu_custom_call.1} parent=47 // pred_fallthru
          _
        // Predicated region
        $region61: #{tpu_custom_call.1} parent=47 // pred_check
          %p315 = pneg %p152
        $region62: #{tpu_custom_call.1} parent=47 // pred_check_branch
          %317 = sbr.rel (%p315) target = $region64
        $region63: #{tpu_custom_call.1} parent=47 // pred_region
          %319 = dma.done [#allocation9], 1024
        $region64: #{tpu_custom_call.1} parent=47 // pred_fallthru
          _
        %s320 = sand.u32 %s34, 1
        %s321 = scalar_lea.sflag [#allocation3], %s320
        %s322 = sand.u32 %s34, 1
        %s323 = smul.addr %s322, 8
        %s324 = scalar_lea.vmem [#allocation2], %s323
        %p325 = pneg %p47
        %p326 = pneg %p44
        %p327 = pneg %p68
        %p328 = pneg %p65
        %p329 = pneg %p89
        %p330 = pneg %p86
        %p331 = pneg %p110
        %p332 = pneg %p107
        %p333 = pneg %p131
        %p334 = pneg %p128
        %p335 = pneg %p152
        %p336 = pneg %p149
        %p337 = pneg %p173
        %p338 = pneg %p170
        %p339 = pneg %p199
        %p340 = pneg %p196
        %s341 = sand.u32 %s186, 1
        %s342 = scalar_lea.sflag [#allocation4], %s341
        %s343 = sand.u32 %s186, 1
        %s344 = smul.addr %s343, 4
        %s345 = scalar_lea.vmem [#allocation10], %s344
        %v347 = vld [vmem:[%s299] sm:$0xff]
        %v348 = vpack.c.bf16 %v347, %v347
        %v349 = vld [vmem:[#allocation5] sm:$0xf]
        %v350 = vld [vmem:[#allocation5 + $0x4] sm:$0xf]
        %v351 = vld [vmem:[#allocation5 + $0x8] sm:$0xf]
        %v352 = vld [vmem:[#allocation5 + $0xc] sm:$0xf]
        %v353 = vld [vmem:[%s2] sm:$0x1]
        %v355 = vperm.slane %v353, 0
        %v361 = vunpack.c.l.b16 %v349
        %v362 = vunpack.c.l.b16 %v350
        %v363 = vunpack.c.l.b16 %v351
        %v364 = vunpack.c.l.b16 %v352
        %v365 = vpack.c.b16 %v362, %v361
        %v366 = vpack.c.b16 %v364, %v363
        %vm369 = vcmask 261120
        %v371 = vsel %vm369, %v348, 0
        %373 = vmatpush.bf16.msra.mxu0 0
        %374 = vmatpush.bf16.msra.mxu0 0
        %375 = vmatpush.bf16.msra.mxu0 0
        %376 = vmatpush.bf16.msra.mxu0 0
        %377 = vmatpush.bf16.msra.mxu0 0
        %378 = vmatpush.bf16.msra.mxu0 0
        %379 = vmatpush.bf16.msra.mxu0 %v366
        %380 = vmatpush.bf16.msra.mxu0 %v365
        %381 = vmatmul.bf16.gmra.mxu0 %v371
        %v382 = vpop.f32.mrf.mxu0
        %v383 = vadd.f32 %v355, %v382
        %v384 = vpop.f32.mrf.mxu0
        %385 = vdwg.mxu0
        %v386 = vpack.c.bf16 %v383, %v383
        %v387 = vunpack.c.l.bf16 %v386
        %v388 = vmax.f32 %v387, 0.0
        %v389 = vpack.c.bf16 %v388, %v388
        %v390 = vld [vmem:[#allocation7] sm:$0xf]
        %v391 = vld [vmem:[#allocation7 + $0x4] sm:$0xf]
        %v392 = vld [vmem:[#allocation7 + $0x8] sm:$0xf]
        %v393 = vld [vmem:[#allocation7 + $0xc] sm:$0xf]
        %v394 = vld [vmem:[#allocation7 + $0x10] sm:$0xf]
        %v395 = vld [vmem:[#allocation7 + $0x14] sm:$0xf]
        %v396 = vld [vmem:[#allocation7 + $0x18] sm:$0xf]
        %v397 = vld [vmem:[#allocation7 + $0x1c] sm:$0xf]
        %v398 = vld [vmem:[#allocation7 + $0x20] sm:$0xf]
        %v399 = vld [vmem:[#allocation7 + $0x24] sm:$0xf]
        %v400 = vld [vmem:[#allocation7 + $0x28] sm:$0xf]
        %v401 = vld [vmem:[#allocation7 + $0x2c] sm:$0xf]
        %v402 = vld [vmem:[#allocation7 + $0x30] sm:$0xf]
        %v403 = vld [vmem:[#allocation7 + $0x34] sm:$0xf]
        %v404 = vld [vmem:[#allocation7 + $0x38] sm:$0xf]
        %v405 = vld [vmem:[#allocation7 + $0x3c] sm:$0xf]
        %v406 = vld [vmem:[%s4] sm:$0x1]
        %v408 = vperm.slane %v406, 0
        %v426 = vunpack.c.l.b16 %v390
        %v427 = vunpack.c.l.b16 %v391
        %v428 = vunpack.c.l.b16 %v392
        %v429 = vunpack.c.l.b16 %v393
        %v430 = vunpack.c.l.b16 %v394
        %v431 = vunpack.c.l.b16 %v395
        %v432 = vunpack.c.l.b16 %v396
        %v433 = vunpack.c.l.b16 %v397
        %v434 = vunpack.c.l.b16 %v398
        %v435 = vunpack.c.l.b16 %v399
        %v436 = vunpack.c.l.b16 %v400
        %v437 = vunpack.c.l.b16 %v401
        %v438 = vunpack.c.l.b16 %v402
        %v439 = vunpack.c.l.b16 %v403
        %v440 = vunpack.c.l.b16 %v404
        %v441 = vunpack.c.l.b16 %v405
        %v442 = vpack.c.b16 %v427, %v426
        %v443 = vpack.c.b16 %v429, %v428
        %v444 = vpack.c.b16 %v431, %v430
        %v445 = vpack.c.b16 %v433, %v432
        %v446 = vpack.c.b16 %v435, %v434
        %v447 = vpack.c.b16 %v437, %v436
        %v448 = vpack.c.b16 %v439, %v438
        %v449 = vpack.c.b16 %v441, %v440
        %458 = vmatpush.bf16.msra.mxu0 %v449
        %459 = vmatpush.bf16.msra.mxu0 %v448
        %460 = vmatpush.bf16.msra.mxu0 %v447
        %461 = vmatpush.bf16.msra.mxu0 %v446
        %462 = vmatpush.bf16.msra.mxu0 %v445
        %463 = vmatpush.bf16.msra.mxu0 %v444
        %464 = vmatpush.bf16.msra.mxu0 %v443
        %465 = vmatpush.bf16.msra.mxu0 %v442
        %466 = vmatmul.bf16.gmra.mxu0 %v389
        %v467 = vpop.f32.mrf.mxu0
        %v468 = vadd.f32 %v408, %v467
        %v469 = vpop.f32.mrf.mxu0
        %470 = vdwg.mxu0
        %v471 = vpack.c.bf16 %v468, %v468
        %v472 = vunpack.c.l.bf16 %v471
        %v473 = vmax.f32 %v472, 0.0
        %v474 = vpack.c.bf16 %v473, %v473
        %v475 = vld [vmem:[#allocation8] sm:$0xf]
        %v476 = vld [vmem:[#allocation8 + $0x4] sm:$0xf]
        %v477 = vld [vmem:[#allocation8 + $0x8] sm:$0xf]
        %v478 = vld [vmem:[#allocation8 + $0xc] sm:$0xf]
        %v479 = vld [vmem:[#allocation8 + $0x10] sm:$0xf]
        %v480 = vld [vmem:[#allocation8 + $0x14] sm:$0xf]
        %v481 = vld [vmem:[#allocation8 + $0x18] sm:$0xf]
        %v482 = vld [vmem:[#allocation8 + $0x1c] sm:$0xf]
        %v483 = vld [vmem:[#allocation8 + $0x20] sm:$0xf]
        %v484 = vld [vmem:[#allocation8 + $0x24] sm:$0xf]
        %v485 = vld [vmem:[#allocation8 + $0x28] sm:$0xf]
        %v486 = vld [vmem:[#allocation8 + $0x2c] sm:$0xf]
        %v487 = vld [vmem:[#allocation8 + $0x30] sm:$0xf]
        %v488 = vld [vmem:[#allocation8 + $0x34] sm:$0xf]
        %v489 = vld [vmem:[#allocation8 + $0x38] sm:$0xf]
        %v490 = vld [vmem:[#allocation8 + $0x3c] sm:$0xf]
        %v491 = vld [vmem:[%s6] sm:$0x1]
        %v493 = vperm.slane %v491, 0
        %v511 = vunpack.c.l.b16 %v475
        %v512 = vunpack.c.l.b16 %v476
        %v513 = vunpack.c.l.b16 %v477
        %v514 = vunpack.c.l.b16 %v478
        %v515 = vunpack.c.l.b16 %v479
        %v516 = vunpack.c.l.b16 %v480
        %v517 = vunpack.c.l.b16 %v481
        %v518 = vunpack.c.l.b16 %v482
        %v519 = vunpack.c.l.b16 %v483
        %v520 = vunpack.c.l.b16 %v484
        %v521 = vunpack.c.l.b16 %v485
        %v522 = vunpack.c.l.b16 %v486
        %v523 = vunpack.c.l.b16 %v487
        %v524 = vunpack.c.l.b16 %v488
        %v525 = vunpack.c.l.b16 %v489
        %v526 = vunpack.c.l.b16 %v490
        %v527 = vpack.c.b16 %v512, %v511
        %v528 = vpack.c.b16 %v514, %v513
        %v529 = vpack.c.b16 %v516, %v515
        %v530 = vpack.c.b16 %v518, %v517
        %v531 = vpack.c.b16 %v520, %v519
        %v532 = vpack.c.b16 %v522, %v521
        %v533 = vpack.c.b16 %v524, %v523
        %v534 = vpack.c.b16 %v526, %v525
        %543 = vmatpush.bf16.msra.mxu0 %v534
        %544 = vmatpush.bf16.msra.mxu0 %v533
        %545 = vmatpush.bf16.msra.mxu0 %v532
        %546 = vmatpush.bf16.msra.mxu0 %v531
        %547 = vmatpush.bf16.msra.mxu0 %v530
        %548 = vmatpush.bf16.msra.mxu0 %v529
        %549 = vmatpush.bf16.msra.mxu0 %v528
        %550 = vmatpush.bf16.msra.mxu0 %v527
        %551 = vmatmul.bf16.gmra.mxu0 %v474
        %v552 = vpop.f32.mrf.mxu0
        %v553 = vadd.f32 %v493, %v552
        %v554 = vpop.f32.mrf.mxu0
        %555 = vdwg.mxu0
        %v556 = vpack.c.bf16 %v553, %v553
        %557 = vst [vmem:[%s345] sm:$0xf] %v556
        %s558 = sand.u32 %s186, 1
        %s559 = scalar_lea.sflag [#allocation4], %s558
        %s560 = sand.u32 %s186, 1
        %s561 = smul.addr %s560, 4
        %s562 = scalar_lea.vmem [#allocation10], %s561
        // Predicated region
        $region65: #{tpu_custom_call.1} parent=47 // pred_check
          %p563 = pneg %p196
        $region66: #{tpu_custom_call.1} parent=47 // pred_check_branch
          %565 = sbr.rel (%p563) target = $region68
        $region67: #{tpu_custom_call.1} parent=47 // pred_region
          %567 = vsyncadd %s559, 0
          %s568 = smul.addr %s26, 4
          %s569 = scalar_lea.hbm %s7, %s568
          %s571 = sshll.u32 %s562, 4
          %s572 = int_to_ptr.vmem [resolvable:$true] %s571
          %s573 = sshll.u32 %s569, 4
          %s574 = int_to_ptr.hbm [resolvable:$true] %s573
          %576 = dma.vmem_to_hbm [thread:$0]  %s572, 64, %s574, %s559
        $region68: #{tpu_custom_call.1} parent=47 // pred_fallthru
          _
      $region48: #{tpu_custom_call.1} parent=5 // pred_fallthru
        _
      %p577 = scmp.le.s32.totalorder 2, %s21
      // Predicated region
      $region69: #{tpu_custom_call.1} parent=5 // pred_check
        %p578 = pneg %p577
      $region70: #{tpu_custom_call.1} parent=5 // pred_check_branch
        %580 = sbr.rel (%p578) target = $region72
      $region71: #{tpu_custom_call.1} parent=5 // pred_region
        %s581 = ssub.s32 %s21, 2
        // Predicated region
        $region73: #{tpu_custom_call.1} parent=71 // pred_check
          %p582 = pneg %p202
        $region74: #{tpu_custom_call.1} parent=71 // pred_check_branch
          %584 = sbr.rel (%p582) target = $region76
        $region75: #{tpu_custom_call.1} parent=71 // pred_region
          %s585 = sand.u32 %s187, 1
          %s586 = scalar_lea.sflag [#allocation4], %s585
          %s587 = sand.u32 %s187, 1
          %s588 = smul.addr %s587, 4
          %s589 = scalar_lea.vmem [#allocation10], %s588
          %591 = dma.done %s586, 64
        $region76: #{tpu_custom_call.1} parent=71 // pred_fallthru
          _
      $region72: #{tpu_custom_call.1} parent=5 // pred_fallthru
        _
    $region6: #{tpu_custom_call.1} parent=1 // loop_footer
      %s25 = sadd.s32 1, %s21
    $region7: #{tpu_custom_call.1} parent=1 // loop_footer_branch
      %20 = sbr.rel target = $region3
    $region8: #{tpu_custom_call.1} parent=1 // loop_exit
      _
    %592 = vsyncpa [#allocation3], 1
    %s593 = scalar_lea.sflag [#allocation3], 1
    %594 = vsyncpa %s593, 1
    %595 = vsyncpa [#allocation6], 1
    %596 = vsyncpa [#allocation9], 1
    %597 = vsyncpa [#allocation4], 1
    %s598 = scalar_lea.sflag [#allocation4], 1
    %599 = vsyncpa %s598, 1

</llo_original>
